<compile_context>
chip_gen: v6e
topology: v6e:2x2x1
jax: 0.10.0
libtpu: 0.0.40
codegen_flags: <defaults>
</compile_context>

<pallas_src>
import functools

import jax
import jax.numpy as jnp
from jax import lax
from jax.experimental import pallas as pl
from jax.experimental.pallas import tpu as pltpu

_PREC_HIGHEST = jax.lax.Precision.HIGHEST
_DEFAULT_SCOPED_VMEM = 16 * 1024 * 1024


# ---------------------------------------------------------------------------
# helpers
# ---------------------------------------------------------------------------
def _round_up(x, m):
    return (x + m - 1) // m * m


def _pick_tile_m(m, max_tile=512):
    """Large MXU-friendly row tiles (feedback: tile_m=8 starves the MXU).
    Keeps >=2 grid steps when the problem allows it (v7x has 2 TensorCores)."""
    if m <= 16:
        return _round_up(max(m, 8), 8)
    return max(8, min(max_tile, _round_up(pl.cdiv(m, 2), 8)))


def _pick_tile_h(h, max_tile=512):
    """Split large hidden dims so the (tile_m, H) f32 GELU intermediate and the
    weight slabs fit a v7x-sized (64 MiB) VMEM budget with headroom."""
    if h <= max_tile:
        return h
    for cand in (512, 256, 128):
        if h % cand == 0:
            return cand
    return h


def _spec(shape, index_map, single_buffer):
    # Blocks whose index never changes across the grid do not need the default
    # double buffering: Buffered(1) halves their VMEM footprint at zero cost.
    if single_buffer:
        return pl.BlockSpec(shape, index_map, pipeline_mode=pl.Buffered(1))
    return pl.BlockSpec(shape, index_map)


def _const_spec(shape, single_buffer):
    return _spec(shape, lambda *_: (0,) * len(shape), single_buffer)


def _maybe_buffered_call(run, want_buffered):
    """Try single-buffered constant weights; fall back to default pipelining if
    this jax/libtpu combination rejects pipeline_mode=pl.Buffered(1)."""
    if not want_buffered:
        return run(False)
    try:
        return run(True)
    except Exception:
        return run(False)


def _compiler_params(dimension_semantics, vmem_bytes_estimate=0):
    kwargs = dict(dimension_semantics=dimension_semantics)
    if vmem_bytes_estimate > _DEFAULT_SCOPED_VMEM:
        # Only raise the scoped-VMEM ceiling when large tiles actually need it
        # (v7x: 64 MiB physical VMEM, 32 MiB scoped default -> keep headroom).
        kwargs["vmem_limit_bytes"] = int(
            min(100 * 1024 * 1024, max(32 * 1024 * 1024, 2 * vmem_bytes_estimate)))
    return pltpu.CompilerParams(**kwargs)


def _patchify(x, patch):
    """(B, Cin, H, W) -> (B, T, Cin*patch*patch).  Pure layout op; the (c,u,v)
    flattening order matches torch Conv2d weight layout, so the stride==kernel
    Conv2d patch-breaker is exactly a linear layer over these vectors."""
    b, cin, h, w = x.shape
    hp, wp = h // patch, w // patch
    xp = x.reshape(b, cin, hp, patch, wp, patch)
    xp = xp.transpose(0, 2, 4, 1, 3, 5)          # (B, hp, wp, Cin, P, P)
    return xp.reshape(b, hp * wp, cin * patch * patch)


# ---------------------------------------------------------------------------
# kernels
# ---------------------------------------------------------------------------
def _linear_kernel(x_ref, w_ref, b_ref, o_ref):
    y = jnp.dot(x_ref[...].astype(w_ref.dtype), w_ref[...],
                preferred_element_type=jnp.float32)
    o_ref[...] = (y + b_ref[...].astype(jnp.float32)).astype(o_ref.dtype)


def _channel_mixer_kernel(x_ref, gamma_ref, beta_ref, w1_ref, b1_ref, w2_ref,
                          b2_ref, o_ref, xn_ref, acc_ref, *, eps,
                          approximate_gelu):
    """out = x + fc2(gelu(fc1(LayerNorm(x)))).  Hidden dim split over grid axis 1."""
    @pl.when(pl.program_id(1) == 0)
    def _init():
        x = x_ref[...].astype(jnp.float32)
        mu = jnp.mean(x, axis=-1, keepdims=True)
        xc = x - mu
        var = jnp.mean(xc * xc, axis=-1, keepdims=True)
        xn = xc * lax.rsqrt(var + eps)
        xn = xn * gamma_ref[...].astype(jnp.float32) + beta_ref[...].astype(jnp.float32)
        xn_ref[...] = xn.astype(xn_ref.dtype)               # bf16 (or f32) MXU operand
        # Fold the residual and the fc2 bias into the f32 accumulator once.
        acc_ref[...] = x + b2_ref[...].astype(jnp.float32)

    h = jnp.dot(xn_ref[...], w1_ref[...], preferred_element_type=jnp.float32)
    h = h + b1_ref[...].astype(jnp.float32)
    # nn.GELU() default = exact erf; approximate=True (tanh/EUP) if accuracy permits.
    h = jax.nn.gelu(h, approximate=approximate_gelu)
    acc_ref[...] += jnp.dot(h.astype(w2_ref.dtype), w2_ref[...],
                            preferred_element_type=jnp.float32)
    o_ref[...] = acc_ref[...].astype(o_ref.dtype)


def _token_mixer_kernel(x_ref, gamma_ref, beta_ref, w1_ref, b1_ref, w2_ref,
                        b2_ref, o_ref, *, eps, approximate_gelu):
    """out = x + transpose(fc2(gelu(fc1(transpose(LayerNorm(x)))))), per batch."""
    x = x_ref[0].astype(jnp.float32)                        # (T, C)
    mu = jnp.mean(x, axis=-1, keepdims=True)
    xc = x - mu
    var = jnp.mean(xc * xc, axis=-1, keepdims=True)
    xn = xc * lax.rsqrt(var + eps)
    xn = xn * gamma_ref[...].astype(jnp.float32) + beta_ref[...].astype(jnp.float32)

    xt = jnp.transpose(xn, (1, 0)).astype(w1_ref.dtype)     # (C, T)
    h = jnp.dot(xt, w1_ref[...], preferred_element_type=jnp.float32)
    h = jax.nn.gelu(h + b1_ref[...].astype(jnp.float32), approximate=approximate_gelu)
    y = jnp.dot(h.astype(w2_ref.dtype), w2_ref[...], preferred_element_type=jnp.float32)
    y = y + b2_ref[...].astype(jnp.float32)                 # (C, T)
    o_ref[0] = (x + jnp.transpose(y, (1, 0))).astype(o_ref.dtype)


# ---------------------------------------------------------------------------
# wrappers
# ---------------------------------------------------------------------------
def pallas_linear(x2, w, b, *, use_bf16=True, tile_m=None, buffered_weights=True):
    """(M, K) @ (K, N) + b with row tiling (patch embedding and classifier head)."""
    m, k = x2.shape
    n = w.shape[1]
    wdt = jnp.bfloat16 if use_bf16 else jnp.float32
    w = w.astype(wdt)
    tm = tile_m or _pick_tile_m(m)
    assert tm % 8 == 0
    mp = _round_up(m, tm)
    xp = jnp.pad(x2, ((0, mp - m), (0, 0))) if mp != m else x2
    vmem_est = 4 * tm * (k + n) * 4 + 2 * k * n * (2 if use_bf16 else 4)

    def run(buffered):
        return pl.pallas_call(
            _linear_kernel,
            out_shape=jax.ShapeDtypeStruct((mp, n), x2.dtype),
            grid_spec=pltpu.PrefetchScalarGridSpec(
                num_scalar_prefetch=0,
                grid=(mp // tm,),
                in_specs=[
                    pl.BlockSpec((tm, k), lambda i: (i, 0)),
                    _const_spec((k, n), buffered),
                    _const_spec((1, n), buffered),
                ],
                out_specs=pl.BlockSpec((tm, n), lambda i: (i, 0)),
            ),
            compiler_params=_compiler_params(("parallel",), vmem_est),
        )(xp, w, b)

    out = _maybe_buffered_call(run, buffered_weights)
    return out[:m]


def channel_mixer(x, p, *, eps=1e-5, use_bf16=True, approximate_gelu=False,
                  tile_m=None, tile_h=None, buffered_weights=True):
    """Channel_Mixer: out = x + MLP_Block(LayerNorm(x)) over the channel dim."""
    bsz, t, c = x.shape
    wdt = jnp.bfloat16 if use_bf16 else jnp.float32
    pbytes = 2 if use_bf16 else 4
    w1 = p["w1"].astype(wdt)
    w2 = p["w2"].astype(wdt)
    h = w1.shape[1]

    m = bsz * t
    tm = tile_m or _pick_tile_m(m)
    th = tile_h or _pick_tile_h(h)
    assert tm % 8 == 0
    assert h % th == 0, "hidden dim must be divisible by tile_h"
    mp = _round_up(m, tm)

    x2 = x.reshape(m, c)
    if mp != m:                                   # padded rows are discarded below
        x2 = jnp.pad(x2, ((0, mp - m), (0, 0)))

    grid = (mp // tm, h // th)                    # reduction (hidden) axis last
    nh = grid[1]
    kernel = functools.partial(_channel_mixer_kernel, eps=eps,
                               approximate_gelu=approximate_gelu)
    cost = pl.CostEstimate(
        flops=int(4 * mp * c * h + 12 * mp * c),
        transcendentals=int(mp * h),
        bytes_accessed=int(2 * mp * c * 4 + 2 * c * h * pbytes + (3 * c + h) * 4),
    )
    vmem_est = (4 * tm * c * 4                    # x + out double buffers
                + 4 * c * th * pbytes             # w1/w2 blocks (worst case)
                + tm * c * (pbytes + 4)           # xn + acc scratch
                + tm * th * 4)                    # hidden intermediate

    def run(buffered):
        weight_sb = buffered and nh == 1          # Buffered(1) only for constant blocks
        return pl.pallas_call(
            kernel,
            out_shape=jax.ShapeDtypeStruct((mp, c), x.dtype),
            grid_spec=pltpu.PrefetchScalarGridSpec(
                num_scalar_prefetch=0,
                grid=grid,
                in_specs=[
                    pl.BlockSpec((tm, c), lambda i, k: (i, 0)),      # x (resident over k)
                    _const_spec((1, c), buffered),                   # gamma
                    _const_spec((1, c), buffered),                   # beta
                    _spec((c, th), lambda i, k: (0, k), weight_sb),  # w1 slice
                    _spec((1, th), lambda i, k: (0, k), weight_sb),  # b1 slice
                    _spec((th, c), lambda i, k: (k, 0), weight_sb),  # w2 slice
                    _const_spec((1, c), buffered),                   # b2
                ],
                out_specs=pl.BlockSpec((tm, c), lambda i, k: (i, 0)),
                scratch_shapes=[pltpu.VMEM((tm, c), wdt),            # LN(x) MXU operand
                                pltpu.VMEM((tm, c), jnp.float32)],   # f32 accumulator
            ),
            compiler_params=_compiler_params(("parallel", "arbitrary"), vmem_est),
            cost_estimate=cost,
            input_output_aliases={0: 0},          # reuse the x buffer for the output
        )(x2, p["gamma"], p["beta"], w1, p["b1"], w2, p["b2"])

    out2 = _maybe_buffered_call(run, buffered_weights)
    return out2[:m].reshape(bsz, t, c)


def token_mixer(x, p, *, eps=1e-5, use_bf16=True, approximate_gelu=False,
                buffered_weights=True):
    """Token_Mixer: LayerNorm over channels, MLP over the patch dim, residual."""
    bsz, t, c = x.shape
    wdt = jnp.bfloat16 if use_bf16 else jnp.float32
    pbytes = 2 if use_bf16 else 4
    w1 = p["w1"].astype(wdt)
    w2 = p["w2"].astype(wdt)
    ht = w1.shape[1]

    kernel = functools.partial(_token_mixer_kernel, eps=eps,
                               approximate_gelu=approximate_gelu)
    cost = pl.CostEstimate(
        flops=int(4 * bsz * c * t * ht + 12 * bsz * t * c),
        transcendentals=int(bsz * c * ht),
        bytes_accessed=int(2 * bsz * t * c * 4 + 2 * t * ht * pbytes + (2 * c + ht + t) * 4),
    )
    vmem_est = 6 * t * c * 4 + 2 * t * ht * pbytes + c * ht * 4

    def run(buffered):
        return pl.pallas_call(
            kernel,
            out_shape=jax.ShapeDtypeStruct((bsz, t, c), x.dtype),
            grid_spec=pltpu.PrefetchScalarGridSpec(
                num_scalar_prefetch=0,
                grid=(bsz,),
                in_specs=[
                    pl.BlockSpec((1, t, c), lambda b: (b, 0, 0)),
                    _const_spec((1, c), buffered),   # gamma
                    _const_spec((1, c), buffered),   # beta
                    _const_spec((t, ht), buffered),  # w1
                    _const_spec((1, ht), buffered),  # b1
                    _const_spec((ht, t), buffered),  # w2
                    _const_spec((1, t), buffered),   # b2
                ],
                out_specs=pl.BlockSpec((1, t, c), lambda b: (b, 0, 0)),
            ),
            compiler_params=_compiler_params(("parallel",), vmem_est),
            cost_estimate=cost,
            input_output_aliases={0: 0},
        )(x, p["gamma"], p["beta"], w1, p["b1"], w2, p["b2"])

    return _maybe_buffered_call(run, buffered_weights)


def mlp_mixer_forward(x_img, params, *, patch_size, eps=1e-5, use_bf16=True,
                      approximate_gelu=False):
    """Full MLP_Mixer.forward: patch embedding -> mixer layers -> GAP -> head."""
    bsz = x_img.shape[0]
    patches = _patchify(x_img, patch_size)                   # pure layout
    _, t, k = patches.shape
    c = params["patch_w"].shape[1]
    tokens = pallas_linear(patches.reshape(bsz * t, k),
                           params["patch_w"], params["patch_b"],
                           use_bf16=use_bf16).reshape(bsz, t, c)
    for layer in params["layers"]:
        tokens = token_mixer(tokens, layer["token"], eps=eps, use_bf16=use_bf16,
                             approximate_gelu=approximate_gelu)
        tokens = channel_mixer(tokens, layer["channel"], eps=eps, use_bf16=use_bf16,
                               approximate_gelu=approximate_gelu)
    # Global average pool over patches: trivial bandwidth-bound reduction, left to XLA.
    pooled = jnp.mean(tokens, axis=1)
    return pallas_linear(pooled, params["head_w"], params["head_b"],
                         use_bf16=use_bf16)


# ---------------------------------------------------------------------------
# parameters + pure-JAX reference (for verification)
# ---------------------------------------------------------------------------
def init_params(key, *, image_shape, patch_size, num_classes, num_mixers,
                num_features, expansion_token=4, expansion_channel=0.5):
    h_img = image_shape[0]
    in_ch = image_shape[2] if len(image_shape) == 3 else 1
    assert h_img % patch_size == 0
    num_patches = (h_img // patch_size) ** 2
    c = num_features
    k_patch = in_ch * patch_size * patch_size
    ht = int(expansion_token * num_patches)
    hc = int(expansion_channel * c)

    keys = iter(jax.random.split(key, 4 + 12 * num_mixers))

    def dense(fan_in, shape):
        return jax.random.normal(next(keys), shape, jnp.float32) / jnp.sqrt(fan_in)

    def bias(shape):
        return 0.01 * jax.random.normal(next(keys), shape, jnp.float32)

    def ln():
        gamma = 1.0 + 0.1 * jax.random.normal(next(keys), (1, c), jnp.float32)
        beta = 0.1 * jax.random.normal(next(keys), (1, c), jnp.float32)
        return gamma, beta

    params = {
        "patch_w": dense(k_patch, (k_patch, c)),
        "patch_b": bias((1, c)),
        "head_w": dense(c, (c, num_classes)),
        "head_b": bias((1, num_classes)),
        "layers": [],
    }
    for _ in range(num_mixers):
        tg, tb = ln()
        token = {"gamma": tg, "beta": tb,
                 "w1": dense(num_patches, (num_patches, ht)), "b1": bias((1, ht)),
                 "w2": dense(ht, (ht, num_patches)), "b2": bias((1, num_patches))}
        cg, cb = ln()
        channel = {"gamma": cg, "beta": cb,
                   "w1": dense(c, (c, hc)), "b1": bias((1, hc)),
                   "w2": dense(hc, (hc, c)), "b2": bias((1, c))}
        params["layers"].append({"token": token, "channel": channel})
    return params


def _ref_layernorm(x, gamma, beta, eps=1e-5):
    xf = x.astype(jnp.float32)
    mu = jnp.mean(xf, axis=-1, keepdims=True)
    var = jnp.mean((xf - mu) ** 2, axis=-1, keepdims=True)
    return (xf - mu) / jnp.sqrt(var + eps) * gamma[0] + beta[0]


def _ref_mlp(x, w1, b1, w2, b2, approximate_gelu=False):
    h = jax.nn.gelu(jnp.dot(x, w1, precision=_PREC_HIGHEST) + b1[0],
                    approximate=approximate_gelu)
    return jnp.dot(h, w2, precision=_PREC_HIGHEST) + b2[0]


def reference_forward(x_img, params, *, patch_size, eps=1e-5, approximate_gelu=False):
    tok = jnp.dot(_patchify(x_img, patch_size), params["patch_w"],
                  precision=_PREC_HIGHEST) + params["patch_b"][0]
    for layer in params["layers"]:
        tp = layer["token"]
        y = _ref_layernorm(tok, tp["gamma"], tp["beta"], eps)
        y = jnp.swapaxes(y, 1, 2)
        y = _ref_mlp(y, tp["w1"], tp["b1"], tp["w2"], tp["b2"], approximate_gelu)
        tok = tok + jnp.swapaxes(y, 1, 2)
        cp = layer["channel"]
        y = _ref_layernorm(tok, cp["gamma"], cp["beta"], eps)
        tok = tok + _ref_mlp(y, cp["w1"], cp["b1"], cp["w2"], cp["b2"], approximate_gelu)
    pooled = jnp.mean(tok, axis=1)
    return jnp.dot(pooled, params["head_w"], precision=_PREC_HIGHEST) + params["head_b"][0]


# ---------------------------------------------------------------------------
# self-test
# ---------------------------------------------------------------------------
if __name__ == "__main__":
    # Small config consistent with
    # MLP_Mixer(image_shape=(16,16,3), patch_size=4, num_classes=10,
    #           num_mixers=2, num_features=32, expansion_token=4,
    #           expansion_channel=0.5, dropout=0.5)  in eval mode.
    image_shape = (16, 16, 3)
    patch_size = 4
    num_classes = 10
    num_mixers = 2
    num_features = 32
    batch = 2

    root = jax.random.PRNGKey(0)
    kp, kx, kextra = jax.random.split(root, 3)
    params = init_params(kp, image_shape=image_shape, patch_size=patch_size,
                         num_classes=num_classes, num_mixers=num_mixers,
                         num_features=num_features, expansion_token=4,
                         expansion_channel=0.5)
    x_img = jax.random.normal(
        kx, (batch, image_shape[2], image_shape[0], image_shape[1]), jnp.float32)

    ref = reference_forward(x_img, params, patch_size=patch_size)

    # (1) f32 MXU path: tight check of kernel math / tiling / padding.
    out_f32 = jax.block_until_ready(
        mlp_mixer_forward(x_img, params, patch_size=patch_size, use_bf16=False))
    assert out_f32.shape == (batch, num_classes)
    err_f32 = float(jnp.max(jnp.abs(out_f32 - ref)))
    assert err_f32 < 5e-3, f"f32 path max abs err {err_f32}"

    # (2) bf16 MXU operands, f32 accumulation (the performance configuration).
    out_bf16 = jax.block_until_ready(
        mlp_mixer_forward(x_img, params, patch_size=patch_size, use_bf16=True))
    scale = float(jnp.max(jnp.abs(ref))) + 1e-6
    err_bf16 = float(jnp.max(jnp.abs(out_bf16 - ref)))
    assert err_bf16 / scale < 0.1, f"bf16 path rel err {err_bf16 / scale}"

    # (3) Exercise the channel-mixer's M-padding + hidden-split grid path.
    kk = jax.random.split(kextra, 7)
    bc, tc, cc, hh = 3, 10, 128, 256
    xc = jax.random.normal(kk[0], (bc, tc, cc), jnp.float32)
    pc = {"gamma": 1.0 + 0.1 * jax.random.normal(kk[1], (1, cc), jnp.float32),
          "beta": 0.1 * jax.random.normal(kk[2], (1, cc), jnp.float32),
          "w1": jax.random.normal(kk[3], (cc, hh), jnp.float32) / jnp.sqrt(cc),
          "b1": 0.01 * jax.random.normal(kk[4], (1, hh), jnp.float32),
          "w2": jax.random.normal(kk[5], (hh, cc), jnp.float32) / jnp.sqrt(hh),
          "b2": 0.01 * jax.random.normal(kk[6], (1, cc), jnp.float32)}
    got = jax.block_until_ready(
        channel_mixer(xc, pc, use_bf16=False, tile_m=16, tile_h=128))
    want = xc + _ref_mlp(_ref_layernorm(xc, pc["gamma"], pc["beta"]),
                         pc["w1"], pc["b1"], pc["w2"], pc["b2"])
    err_split = float(jnp.max(jnp.abs(got - want)))
    assert err_split < 5e-3, f"split-grid channel mixer max abs err {err_split}"

    print("KERNEL_OK")
</pallas_src>

<mosaic_0001>
module attributes {stable_mosaic.version = 11 : i64} {
  func.func @_linear_kernel(%arg0: i32, %arg1: memref<16x48xf32, #tpu.memory_space<vmem>>, %arg2: memref<48x32xf32, #tpu.memory_space<vmem>>, %arg3: memref<1x32xf32, #tpu.memory_space<vmem>>, %arg4: memref<16x32xf32, #tpu.memory_space<vmem>>) attributes {dimension_semantics = [#tpu.dimension_semantics<parallel>], iteration_bounds = array<i64: 2>, scalar_prefetch = 0 : i64, scratch_operands = 0 : i64, tpu.core_type = #tpu.core_type<tc>, window_params = [{transform_indices = @transform_0, window_bounds = array<i64: 16, 48>}, {pipeline_mode = #tpu.pipeline_mode<synchronous>, transform_indices = @transform_1, window_bounds = array<i64: 48, 32>}, {pipeline_mode = #tpu.pipeline_mode<synchronous>, transform_indices = @transform_2, window_bounds = array<i64: 1, 32>}, {transform_indices = @transform_3, window_bounds = array<i64: 16, 32>}]} {
    %c0 = arith.constant 0 : index
    %c0_0 = arith.constant 0 : index
    %0 = vector.load %arg1[%c0, %c0_0] : memref<16x48xf32, #tpu.memory_space<vmem>>, vector<16x48xf32>
    %c0_1 = arith.constant 0 : index
    %c0_2 = arith.constant 0 : index
    %1 = vector.load %arg2[%c0_1, %c0_2] : memref<48x32xf32, #tpu.memory_space<vmem>>, vector<48x32xf32>
    %cst = arith.constant dense<0.000000e+00> : vector<16x32xf32>
    %2 = tpu.matmul %0, %1, %cst {dimension_numbers = #tpu.dot_dimension_numbers<[1], [0], [0], [1], [0, 0, 1, 1], [], []>} : vector<16x48xf32>, vector<48x32xf32>, vector<16x32xf32> -> vector<16x32xf32>
    %c0_3 = arith.constant 0 : index
    %c0_4 = arith.constant 0 : index
    %3 = vector.load %arg3[%c0_3, %c0_4] : memref<1x32xf32, #tpu.memory_space<vmem>>, vector<1x32xf32>
    %4 = vector.broadcast %3 : vector<1x32xf32> to vector<16x32xf32>
    %5 = arith.addf %2, %4 : vector<16x32xf32>
    %c0_5 = arith.constant 0 : index
    %c0_6 = arith.constant 0 : index
    %6 = vector.load %arg4[%c0_5, %c0_6] : memref<16x32xf32, #tpu.memory_space<vmem>>, vector<16x32xf32>
    tpu.vector_store %arg4[%c0_5, %c0_6], %5 {strides = array<i32>} : memref<16x32xf32, #tpu.memory_space<vmem>>, vector<16x32xf32>,
    return
  }
  func.func @transform_0(%arg0: i32) -> (i32, i32) {
    %c0_i32 = arith.constant 0 : i32
    %c0_i32_0 = arith.constant 0 : i32
    return %arg0, %c0_i32 : i32, i32
  }
  func.func @transform_1(%arg0: i32) -> (i32, i32) {
    %c0_i32 = arith.constant 0 : i32
    %c0_i32_0 = arith.constant 0 : i32
    %c0_i32_1 = arith.constant 0 : i32
    return %c0_i32, %c0_i32_0 : i32, i32
  }
  func.func @transform_2(%arg0: i32) -> (i32, i32) {
    %c0_i32 = arith.constant 0 : i32
    %c0_i32_0 = arith.constant 0 : i32
    %c0_i32_1 = arith.constant 0 : i32
    return %c0_i32, %c0_i32_0 : i32, i32
  }
  func.func @transform_3(%arg0: i32) -> (i32, i32) {
    %c0_i32 = arith.constant 0 : i32
    %c0_i32_0 = arith.constant 0 : i32
    return %arg0, %c0_i32 : i32, i32
  }
}

module attributes {stable_mosaic.version = 11 : i64} {
  func.func @_linear_kernel(%arg0: i32, %arg1: memref<16x48xf32, #tpu.memory_space<vmem>>, %arg2: memref<48x32xf32, #tpu.memory_space<vmem>>, %arg3: memref<1x32xf32, #tpu.memory_space<vmem>>, %arg4: memref<16x32xf32, #tpu.memory_space<vmem>>) attributes {dimension_semantics = [#tpu.dimension_semantics<parallel>], iteration_bounds = array<i64: 2>, scalar_prefetch = 0 : i64, scratch_operands = 0 : i64, tpu.core_type = #tpu.core_type<tc>, window_params = [{transform_indices = @transform_0, window_bounds = array<i64: 16, 48>}, {pipeline_mode = #tpu.pipeline_mode<synchronous>, transform_indices = @transform_1, window_bounds = array<i64: 48, 32>}, {pipeline_mode = #tpu.pipeline_mode<synchronous>, transform_indices = @transform_2, window_bounds = array<i64: 1, 32>}, {transform_indices = @transform_3, window_bounds = array<i64: 16, 32>}]} {
    %c0 = arith.constant 0 : index
    %c0_0 = arith.constant 0 : index
    %0 = vector.load %arg1[%c0, %c0_0] : memref<16x48xf32, #tpu.memory_space<vmem>>, vector<16x48xf32>
    %c0_1 = arith.constant 0 : index
    %c0_2 = arith.constant 0 : index
    %1 = vector.load %arg2[%c0_1, %c0_2] : memref<48x32xf32, #tpu.memory_space<vmem>>, vector<48x32xf32>
    %cst = arith.constant dense<0.000000e+00> : vector<16x32xf32>
    %2 = tpu.matmul %0, %1, %cst {dimension_numbers = #tpu.dot_dimension_numbers<[1], [0], [0], [1], [0, 0, 1, 1], [], []>} : vector<16x48xf32>, vector<48x32xf32>, vector<16x32xf32> -> vector<16x32xf32>
    %c0_3 = arith.constant 0 : index
    %c0_4 = arith.constant 0 : index
    %3 = vector.load %arg3[%c0_3, %c0_4] : memref<1x32xf32, #tpu.memory_space<vmem>>, vector<1x32xf32>
    %4 = vector.broadcast %3 : vector<1x32xf32> to vector<16x32xf32>
    %5 = arith.addf %2, %4 : vector<16x32xf32>
    %c0_5 = arith.constant 0 : index
    %c0_6 = arith.constant 0 : index
    %6 = vector.load %arg4[%c0_5, %c0_6] : memref<16x32xf32, #tpu.memory_space<vmem>>, vector<16x32xf32>
    tpu.vector_store %arg4[%c0_5, %c0_6], %5 {strides = array<i32>} : memref<16x32xf32, #tpu.memory_space<vmem>>, vector<16x32xf32>,
    return
  }
  func.func @transform_0(%arg0: i32) -> (i32, i32) {
    %c0_i32 = arith.constant 0 : i32
    %c0_i32_0 = arith.constant 0 : i32
    return %arg0, %c0_i32 : i32, i32
  }
  func.func @transform_1(%arg0: i32) -> (i32, i32) {
    %c0_i32 = arith.constant 0 : i32
    %c0_i32_0 = arith.constant 0 : i32
    %c0_i32_1 = arith.constant 0 : i32
    return %c0_i32, %c0_i32_0 : i32, i32
  }
  func.func @transform_2(%arg0: i32) -> (i32, i32) {
    %c0_i32 = arith.constant 0 : i32
    %c0_i32_0 = arith.constant 0 : i32
    %c0_i32_1 = arith.constant 0 : i32
    return %c0_i32, %c0_i32_0 : i32, i32
  }
  func.func @transform_3(%arg0: i32) -> (i32, i32) {
    %c0_i32 = arith.constant 0 : i32
    %c0_i32_0 = arith.constant 0 : i32
    return %arg0, %c0_i32 : i32, i32
  }
}

</mosaic_0001>

<llo_original>
// kernel: tpu_custom_call.1
$region0: #{tpu_custom_call.1}
  #allocation0 [shape = 'u32[]', space=smem, size = 0x4, offset = 0x4, fixed_abs, tag = 'smem constant byte address 0x4 - core index']
  #allocation1 [shape = 'u32[144,128]{1,0:T(1,128)}', space=vmem, size = 0x12000, scoped, tag = 'internal scratch']
  %s0 = inlined_call_operand.vmem [shape: f32[32,48], index: 0, kind: input, shape index: {}]
  %s1 = inlined_call_operand.vmem [shape: f32[48,32], index: 1, kind: input, shape index: {}]
  %s2 = inlined_call_operand.vmem [shape: f32[1,32], index: 2, kind: input, shape index: {}]
  %s3 = inlined_call_operand.hbm [shape: f32[32,32], index: 3, kind: output, shape index: {}]
  %s4 = sld [smem:[#allocation0]]
  $region45: #{tpu_custom_call.1} parent=0
    _
  %s6 = ssub.s32 1, %s4
  %s7 = scalar_select 0, %s6, %s4
  $region1: #{tpu_custom_call.1} parent=0
    #allocation2 [shape = 'u8[16384]{0}', space=vmem, size = 0x4000, scoped, tag = 'output window, operand 0']
    #allocation3 [shape = 's32[2]{0}', space=sflag, size = 0x8, scoped, tag = 'scoped memory for tpu_custom_call.1']
    %8 = vsyncpa [#allocation3], 0
    %s9 = scalar_lea.sflag [#allocation3], 1
    %10 = vsyncpa %s9, 0
    loop: start=0, step=1, limit=4
    $region2: #{tpu_custom_call.1} parent=1 // loop_pre_header
      _
    $region3: #{tpu_custom_call.1} parent=1 // loop_header
      %s12 = sphi 0, %s16
      %p13 = scmp.ge.s32.totalorder %s12, 4
      %s22 = sphi 0, %s24
      %s25 = sphi 0, %s22
      %s26 = sphi 0, %s25
      %s42 = sphi 0, %s26
      %s46 = sphi 0, %s46
      %s48 = sphi 0, %s46
      %s49 = sphi 0, %s48
      %s63 = sphi 0, %s49
      %s67 = sphi 0, %s67
      %s69 = sphi 0, %s67
      %s70 = sphi 0, %s69
      %s84 = sphi 0, %s70
      %s90 = sphi 0, %s92
      %s93 = sphi 0, %s90
      %s94 = sphi 0, %s93
      %s110 = sphi 0, %s94
    $region4: #{tpu_custom_call.1} parent=1 // loop_header_branch
      %15 = sbr.rel (%p13) target = $region8
    $region5: #{tpu_custom_call.1} parent=1 // loop_body
      %s17 = ssub.s32 %s12, 1
      %s18 = ssub.s32 %s12, 2
      %s19 = sadd.s32 %s12, 1
      %s20 = ssub.s32 %s12, %s19
      %p21 = scmp.eq.s32.totalorder %s20, 0
      %s23 = sadd.s32 %s22, 1
      %s24 = scalar_select %p21, %s22, %s23
      %p27 = pneg %p21
      %p28 = scmp.eq.s32.totalorder %s12, 1
      %p29 = por %p27, %p28
      %p30 = scmp.ne.s32.totalorder %s22, %s25
      %p31 = scmp.eq.s32.totalorder %s12, 0
      %p32 = por %p30, %p31
      %p33 = scmp.ne.s32.totalorder %s22, %s25
      %p34 = scmp.eq.s32.totalorder %s17, 1
      %p35 = por %p33, %p34
      %p36 = scmp.ne.s32.totalorder %s25, %s26
      %p37 = scmp.eq.s32.totalorder %s17, 0
      %p38 = por %p36, %p37
      %p39 = scmp.ne.s32.totalorder %s25, %s26
      %p40 = scmp.eq.s32.totalorder %s18, 1
      %p41 = por %p39, %p40
      %p43 = scmp.ne.s32.totalorder %s26, %s42
      %p44 = scmp.eq.s32.totalorder %s18, 0
      %p45 = por %p43, %p44
      %s47 = sadd.s32 %s46, 1
      %p50 = scmp.eq.s32.totalorder %s12, 1
      %p51 = scmp.ne.s32.totalorder %s46, %s48
      %p52 = scmp.eq.s32.totalorder %s12, 0
      %p53 = por %p51, %p52
      %p54 = scmp.ne.s32.totalorder %s46, %s48
      %p55 = scmp.eq.s32.totalorder %s17, 1
      %p56 = por %p54, %p55
      %p57 = scmp.ne.s32.totalorder %s48, %s49
      %p58 = scmp.eq.s32.totalorder %s17, 0
      %p59 = por %p57, %p58
      %p60 = scmp.ne.s32.totalorder %s48, %s49
      %p61 = scmp.eq.s32.totalorder %s18, 1
      %p62 = por %p60, %p61
      %p64 = scmp.ne.s32.totalorder %s49, %s63
      %p65 = scmp.eq.s32.totalorder %s18, 0
      %p66 = por %p64, %p65
      %s68 = sadd.s32 %s67, 1
      %p71 = scmp.eq.s32.totalorder %s12, 1
      %p72 = scmp.ne.s32.totalorder %s67, %s69
      %p73 = scmp.eq.s32.totalorder %s12, 0
      %p74 = por %p72, %p73
      %p75 = scmp.ne.s32.totalorder %s67, %s69
      %p76 = scmp.eq.s32.totalorder %s17, 1
      %p77 = por %p75, %p76
      %p78 = scmp.ne.s32.totalorder %s69, %s70
      %p79 = scmp.eq.s32.totalorder %s17, 0
      %p80 = por %p78, %p79
      %p81 = scmp.ne.s32.totalorder %s69, %s70
      %p82 = scmp.eq.s32.totalorder %s18, 1
      %p83 = por %p81, %p82
      %p85 = scmp.ne.s32.totalorder %s70, %s84
      %p86 = scmp.eq.s32.totalorder %s18, 0
      %p87 = por %p85, %p86
      %s88 = ssub.s32 %s12, %s19
      %p89 = scmp.eq.s32.totalorder %s88, 0
      %s91 = sadd.s32 %s90, 1
      %s92 = scalar_select %p89, %s90, %s91
      %p95 = pneg %p89
      %p96 = scmp.eq.s32.totalorder %s12, 1
      %p97 = por %p95, %p96
      %p98 = scmp.ne.s32.totalorder %s90, %s93
      %p99 = scmp.eq.s32.totalorder %s12, 0
      %p100 = por %p98, %p99
      %p101 = scmp.ne.s32.totalorder %s90, %s93
      %p102 = scmp.eq.s32.totalorder %s17, 1
      %p103 = por %p101, %p102
      %p104 = scmp.ne.s32.totalorder %s93, %s94
      %p105 = scmp.eq.s32.totalorder %s17, 0
      %p106 = por %p104, %p105
      %p107 = scmp.ne.s32.totalorder %s93, %s94
      %p108 = scmp.eq.s32.totalorder %s18, 1
      %p109 = por %p107, %p108
      %p111 = scmp.ne.s32.totalorder %s94, %s110
      %p112 = scmp.eq.s32.totalorder %s18, 0
      %p113 = por %p111, %p112
      %p114 = scmp.le.s32.totalorder 1, %s12
      %p115 = scmp.lt.s32.totalorder %s12, 3
      %p116 = pnand %p114, %p115
      %p117 = pneg %p116
      // Predicated region
      $region9: #{tpu_custom_call.1} parent=5 // pred_check
        _
      $region10: #{tpu_custom_call.1} parent=5 // pred_check_branch
        %119 = sbr.rel (%p116) target = $region12
      $region11: #{tpu_custom_call.1} parent=5 // pred_region
        %s120 = ssub.s32 %s12, 1
        // Predicated region
        $region13: #{tpu_custom_call.1} parent=11 // pred_check
          %p121 = pneg %p59
        $region14: #{tpu_custom_call.1} parent=11 // pred_check_branch
          %123 = sbr.rel (%p121) target = $region16
        $region15: #{tpu_custom_call.1} parent=11 // pred_region
          _
        $region16: #{tpu_custom_call.1} parent=11 // pred_fallthru
          _
        // Predicated region
        $region17: #{tpu_custom_call.1} parent=11 // pred_check
          %p124 = pneg %p80
        $region18: #{tpu_custom_call.1} parent=11 // pred_check_branch
          %126 = sbr.rel (%p124) target = $region20
        $region19: #{tpu_custom_call.1} parent=11 // pred_region
          _
        $region20: #{tpu_custom_call.1} parent=11 // pred_fallthru
          _
      $region12: #{tpu_custom_call.1} parent=5 // pred_fallthru
        _
      %p127 = scmp.lt.s32.totalorder %s12, 2
      // Predicated region
      $region21: #{tpu_custom_call.1} parent=5 // pred_check
        %p128 = pneg %p127
      $region22: #{tpu_custom_call.1} parent=5 // pred_check_branch
        %130 = sbr.rel (%p128) target = $region24
      $region23: #{tpu_custom_call.1} parent=5 // pred_region
        // Predicated region
        $region25: #{tpu_custom_call.1} parent=23 // pred_check
          %p131 = pneg %p32
        $region26: #{tpu_custom_call.1} parent=23 // pred_check_branch
          %133 = sbr.rel (%p131) target = $region28
        $region27: #{tpu_custom_call.1} parent=23 // pred_region
          %s134 = smul.u32 2, %s12
          %p135 = scmp.lt.s32.totalorder %s134, 3
          %s136 = scalar_select %p135, %s134, 3
          %s137 = smul.addr %s136, 8
          %s138 = scalar_lea.vmem %s0, %s137
          %s139 = smul.u32 2, %s12
        $region28: #{tpu_custom_call.1} parent=23 // pred_fallthru
          _
      $region24: #{tpu_custom_call.1} parent=5 // pred_fallthru
        _
      %p140 = scmp.le.s32.totalorder 1, %s12
      %p141 = scmp.lt.s32.totalorder %s12, 3
      %p142 = pnand %p140, %p141
      %p143 = pneg %p142
      // Predicated region
      $region29: #{tpu_custom_call.1} parent=5 // pred_check
        _
      $region30: #{tpu_custom_call.1} parent=5 // pred_check_branch
        %145 = sbr.rel (%p142) target = $region32
      $region31: #{tpu_custom_call.1} parent=5 // pred_region
        %s146 = ssub.s32 %s12, 1
        %s147 = smul.u32 2, %s17
        %p148 = scmp.lt.s32.totalorder %s147, 3
        %s149 = scalar_select %p148, %s147, 3
        %s150 = smul.addr %s149, 8
        %s151 = scalar_lea.vmem %s0, %s150
        %p152 = pneg %p38
        %p153 = pneg %p35
        %p154 = pneg %p59
        %p155 = pneg %p56
        %p156 = pneg %p80
        %p157 = pneg %p77
        %p158 = pneg %p106
        %p159 = pneg %p103
        %s160 = sand.u32 %s93, 1
        %s161 = scalar_lea.sflag [#allocation3], %s160
        %s162 = sand.u32 %s93, 1
        %s163 = smul.addr %s162, 16
        %s164 = scalar_lea.vmem [#allocation2], %s163
        %s165 = smul.u32 2, %s17
        %p166 = scmp.lt.s32.totalorder %s165, 3
        %s167 = scalar_select %p166, %s165, 3
        %s168 = smul.addr %s167, 8
        %s169 = scalar_lea.vmem %s0, %s168
        %s170 = smul.u32 2, %s17
        %s171 = smul.u32 2, %s17
        %v172 = vld [vmem:[%s169] sm:$0xff]
        %v173 = vld [vmem:[%s169 + $0x8] sm:$0xff]
        %v174 = vld [vmem:[%s1] sm:$0xff]
        %v175 = vld [vmem:[%s1 + $0x8] sm:$0xff]
        %v176 = vld [vmem:[%s1 + $0x10] sm:$0xff]
        %v177 = vld [vmem:[%s1 + $0x18] sm:$0xff]
        %v178 = vld [vmem:[%s1 + $0x20] sm:$0xff]
        %v179 = vld [vmem:[%s1 + $0x28] sm:$0xff]
        %v180 = vld [vmem:[%s2] sm:$0x1]
        %v182 = vlaneseq
        %v183 = vshrl.u32 %v182, 7
        %v184 = vsub.s32 0, %v183
        %v185 = vrot.slane %v180, %v184
        %vm187 = vcmask 392192
        %v189 = vsel %vm187, %v172, 0
        %v192 = vsel %vm187, %v173, 0
        %194 = vmatprep.subr.mxu0 0.0
        %195 = vmatpush1.msra.mxu0 0.0
        %196 = vmatprep.subr.mxu0 0.0
        %197 = vmatpush1.msra.mxu0 0.0
        %198 = vmatprep.subr.mxu0 0.0
        %199 = vmatpush1.msra.mxu0 0.0
        %200 = vmatprep.subr.mxu0 0.0
        %201 = vmatpush1.msra.mxu0 0.0
        %202 = vmatprep.subr.mxu0 0.0
        %203 = vmatpush1.msra.mxu0 0.0
        %204 = vmatprep.subr.mxu0 0.0
        %205 = vmatpush1.msra.mxu0 0.0
        %206 = vmatprep.subr.mxu0 0.0
        %207 = vmatpush1.msra.mxu0 0.0
        %208 = vmatprep.subr.mxu0 0.0
        %209 = vmatpush1.msra.mxu0 0.0
        %210 = vmatprep.subr.mxu0 0.0
        %211 = vmatpush1.msra.mxu0 0.0
        %212 = vmatprep.subr.mxu0 0.0
        %213 = vmatpush1.msra.mxu0 0.0
        %214 = vmatprep.subr.mxu0 0.0
        %215 = vmatpush1.msra.mxu0 %v179
        %216 = vmatprep.subr.mxu0 0.0
        %217 = vmatpush1.msra.mxu0 %v178
        %218 = vmatprep.subr.mxu0 0.0
        %219 = vmatpush1.msra.mxu0 %v177
        %220 = vmatprep.subr.mxu0 0.0
        %221 = vmatpush1.msra.mxu0 %v176
        %222 = vmatprep.subr.mxu0 0.0
        %223 = vmatpush1.msra.mxu0 %v175
        %224 = vmatprep.subr.mxu0 0.0
        %225 = vmatpush1.msra.mxu0 %v174
        %226 = vmatprep.subr.mxu0 0.0
        %227 = vmatpush2.msra.mxu0 0.0
        %228 = vmatprep.subr.mxu0 0.0
        %229 = vmatpush2.msra.mxu0 0.0
        %230 = vmatprep.subr.mxu0 0.0
        %231 = vmatpush2.msra.mxu0 0.0
        %232 = vmatprep.subr.mxu0 0.0
        %233 = vmatpush2.msra.mxu0 0.0
        %234 = vmatprep.subr.mxu0 0.0
        %235 = vmatpush2.msra.mxu0 0.0
        %236 = vmatprep.subr.mxu0 0.0
        %237 = vmatpush2.msra.mxu0 0.0
        %238 = vmatprep.subr.mxu0 0.0
        %239 = vmatpush2.msra.mxu0 0.0
        %240 = vmatprep.subr.mxu0 0.0
        %241 = vmatpush2.msra.mxu0 0.0
        %242 = vmatprep.subr.mxu0 0.0
        %243 = vmatpush2.msra.mxu0 0.0
        %244 = vmatprep.subr.mxu0 0.0
        %245 = vmatpush2.msra.mxu0 0.0
        %246 = vmatprep.subr.mxu0 0.0
        %247 = vmatpush2.msra.mxu0 0.0
        %248 = vmatprep.subr.mxu0 0.0
        %249 = vmatpush2.msra.mxu0 0.0
        %250 = vmatprep.subr.mxu0 0.0
        %251 = vmatpush2.msra.mxu0 0.0
        %252 = vmatprep.subr.mxu0 0.0
        %253 = vmatpush2.msra.mxu0 0.0
        %254 = vmatprep.subr.mxu0 0.0
        %255 = vmatpush2.msra.mxu0 0.0
        %256 = vmatprep.subr.mxu0 0.0
        %257 = vmatpush2.msra.mxu0 0.0
        %258 = vmatprep.mubr.f32.mxu0 0.0
        %259 = vmatmul.mubr.f32.gmra.mxu0 %v189
        %v260 = vpop.f32.mrf.mxu0
        %v261 = vadd.f32 %v185, %v260
        %v262 = vpop.f32.mrf.mxu0
        %263 = vmatprep.mubr.f32.mxu0 0.0
        %264 = vmatmul.mubr.f32.gmra.mxu0 %v192
        %v265 = vpop.f32.mrf.mxu0
        %v266 = vadd.f32 %v185, %v265
        %v267 = vpop.f32.mrf.mxu0
        %268 = vdwg.mxu0
        %vm269 = vcmask 261120
        %270 = vst.msk [vmem:[%s164] sm:$0xff] %vm269, %v261
        %271 = vst.msk [vmem:[%s164 + $0x8] sm:$0xff] %vm269, %v266
        %s272 = sand.u32 %s93, 1
        %s273 = scalar_lea.sflag [#allocation3], %s272
        %s274 = sand.u32 %s93, 1
        %s275 = smul.addr %s274, 16
        %s276 = scalar_lea.vmem [#allocation2], %s275
        // Predicated region
        $region33: #{tpu_custom_call.1} parent=31 // pred_check
          %p277 = pneg %p103
        $region34: #{tpu_custom_call.1} parent=31 // pred_check_branch
          %279 = sbr.rel (%p277) target = $region36
        $region35: #{tpu_custom_call.1} parent=31 // pred_region
          %s280 = smul.u32 2, %s17
          %s282 = ssub.s32 256, 256
          %283 = vsyncadd %s273, %s282
          %s284 = smul.addr %s280, 128
          %s285 = scalar_lea.hbm %s3, %s284
          %s286 = sshll.u32 %s276, 4
          %s287 = int_to_ptr.vmem [resolvable:$true] %s286
          %292 = dma.vmem_to_hbm [thread:$0]  %s287, 256, %s285, %s273, 128, 128, 8
        $region36: #{tpu_custom_call.1} parent=31 // pred_fallthru
          _
      $region32: #{tpu_custom_call.1} parent=5 // pred_fallthru
        _
      %p293 = scmp.le.s32.totalorder 2, %s12
      // Predicated region
      $region37: #{tpu_custom_call.1} parent=5 // pred_check
        %p294 = pneg %p293
      $region38: #{tpu_custom_call.1} parent=5 // pred_check_branch
        %296 = sbr.rel (%p294) target = $region40
      $region39: #{tpu_custom_call.1} parent=5 // pred_region
        %s297 = ssub.s32 %s12, 2
        // Predicated region
        $region41: #{tpu_custom_call.1} parent=39 // pred_check
          %p298 = pneg %p109
        $region42: #{tpu_custom_call.1} parent=39 // pred_check_branch
          %300 = sbr.rel (%p298) target = $region44
        $region43: #{tpu_custom_call.1} parent=39 // pred_region
          %s301 = sand.u32 %s94, 1
          %s302 = scalar_lea.sflag [#allocation3], %s301
          %s303 = sand.u32 %s94, 1
          %s304 = smul.addr %s303, 16
          %s305 = scalar_lea.vmem [#allocation2], %s304
          %306 = dma.done %s302, 256
        $region44: #{tpu_custom_call.1} parent=39 // pred_fallthru
          _
      $region40: #{tpu_custom_call.1} parent=5 // pred_fallthru
        _
    $region6: #{tpu_custom_call.1} parent=1 // loop_footer
      %s16 = sadd.s32 1, %s12
    $region7: #{tpu_custom_call.1} parent=1 // loop_footer_branch
      %11 = sbr.rel target = $region3
    $region8: #{tpu_custom_call.1} parent=1 // loop_exit
      _
    %307 = vsyncpa [#allocation3], 1
    %s308 = scalar_lea.sflag [#allocation3], 1
    %309 = vsyncpa %s308, 1

// kernel: tpu_custom_call.1
$region0: #{tpu_custom_call.1}
  #allocation0 [shape = 'u32[]', space=smem, size = 0x4, offset = 0x4, fixed_abs, tag = 'smem constant byte address 0x4 - core index']
  #allocation1 [shape = 'u32[144,128]{1,0:T(1,128)}', space=vmem, size = 0x12000, scoped, tag = 'internal scratch']
  %s0 = inlined_call_operand.vmem [shape: f32[32,48], index: 0, kind: input, shape index: {}]
  %s1 = inlined_call_operand.vmem [shape: f32[48,32], index: 1, kind: input, shape index: {}]
  %s2 = inlined_call_operand.vmem [shape: f32[1,32], index: 2, kind: input, shape index: {}]
  %s3 = inlined_call_operand.hbm [shape: f32[32,32], index: 3, kind: output, shape index: {}]
  %s4 = sld [smem:[#allocation0]]
  $region45: #{tpu_custom_call.1} parent=0
    _
  %s6 = ssub.s32 1, %s4
  %s7 = scalar_select 0, %s6, %s4
  $region1: #{tpu_custom_call.1} parent=0
    #allocation2 [shape = 'u8[16384]{0}', space=vmem, size = 0x4000, scoped, tag = 'output window, operand 0']
    #allocation3 [shape = 's32[2]{0}', space=sflag, size = 0x8, scoped, tag = 'scoped memory for tpu_custom_call.1']
    %8 = vsyncpa [#allocation3], 0
    %s9 = scalar_lea.sflag [#allocation3], 1
    %10 = vsyncpa %s9, 0
    loop: start=0, step=1, limit=4
    $region2: #{tpu_custom_call.1} parent=1 // loop_pre_header
      _
    $region3: #{tpu_custom_call.1} parent=1 // loop_header
      %s12 = sphi 0, %s16
      %p13 = scmp.ge.s32.totalorder %s12, 4
      %s22 = sphi 0, %s24
      %s25 = sphi 0, %s22
      %s26 = sphi 0, %s25
      %s42 = sphi 0, %s26
      %s46 = sphi 0, %s46
      %s48 = sphi 0, %s46
      %s49 = sphi 0, %s48
      %s63 = sphi 0, %s49
      %s67 = sphi 0, %s67
      %s69 = sphi 0, %s67
      %s70 = sphi 0, %s69
      %s84 = sphi 0, %s70
      %s90 = sphi 0, %s92
      %s93 = sphi 0, %s90
      %s94 = sphi 0, %s93
      %s110 = sphi 0, %s94
    $region4: #{tpu_custom_call.1} parent=1 // loop_header_branch
      %15 = sbr.rel (%p13) target = $region8
    $region5: #{tpu_custom_call.1} parent=1 // loop_body
      %s17 = ssub.s32 %s12, 1
      %s18 = ssub.s32 %s12, 2
      %s19 = sadd.s32 %s12, 1
      %s20 = ssub.s32 %s12, %s19
      %p21 = scmp.eq.s32.totalorder %s20, 0
      %s23 = sadd.s32 %s22, 1
      %s24 = scalar_select %p21, %s22, %s23
      %p27 = pneg %p21
      %p28 = scmp.eq.s32.totalorder %s12, 1
      %p29 = por %p27, %p28
      %p30 = scmp.ne.s32.totalorder %s22, %s25
      %p31 = scmp.eq.s32.totalorder %s12, 0
      %p32 = por %p30, %p31
      %p33 = scmp.ne.s32.totalorder %s22, %s25
      %p34 = scmp.eq.s32.totalorder %s17, 1
      %p35 = por %p33, %p34
      %p36 = scmp.ne.s32.totalorder %s25, %s26
      %p37 = scmp.eq.s32.totalorder %s17, 0
      %p38 = por %p36, %p37
      %p39 = scmp.ne.s32.totalorder %s25, %s26
      %p40 = scmp.eq.s32.totalorder %s18, 1
      %p41 = por %p39, %p40
      %p43 = scmp.ne.s32.totalorder %s26, %s42
      %p44 = scmp.eq.s32.totalorder %s18, 0
      %p45 = por %p43, %p44
      %s47 = sadd.s32 %s46, 1
      %p50 = scmp.eq.s32.totalorder %s12, 1
      %p51 = scmp.ne.s32.totalorder %s46, %s48
      %p52 = scmp.eq.s32.totalorder %s12, 0
      %p53 = por %p51, %p52
      %p54 = scmp.ne.s32.totalorder %s46, %s48
      %p55 = scmp.eq.s32.totalorder %s17, 1
      %p56 = por %p54, %p55
      %p57 = scmp.ne.s32.totalorder %s48, %s49
      %p58 = scmp.eq.s32.totalorder %s17, 0
      %p59 = por %p57, %p58
      %p60 = scmp.ne.s32.totalorder %s48, %s49
      %p61 = scmp.eq.s32.totalorder %s18, 1
      %p62 = por %p60, %p61
      %p64 = scmp.ne.s32.totalorder %s49, %s63
      %p65 = scmp.eq.s32.totalorder %s18, 0
      %p66 = por %p64, %p65
      %s68 = sadd.s32 %s67, 1
      %p71 = scmp.eq.s32.totalorder %s12, 1
      %p72 = scmp.ne.s32.totalorder %s67, %s69
      %p73 = scmp.eq.s32.totalorder %s12, 0
      %p74 = por %p72, %p73
      %p75 = scmp.ne.s32.totalorder %s67, %s69
      %p76 = scmp.eq.s32.totalorder %s17, 1
      %p77 = por %p75, %p76
      %p78 = scmp.ne.s32.totalorder %s69, %s70
      %p79 = scmp.eq.s32.totalorder %s17, 0
      %p80 = por %p78, %p79
      %p81 = scmp.ne.s32.totalorder %s69, %s70
      %p82 = scmp.eq.s32.totalorder %s18, 1
      %p83 = por %p81, %p82
      %p85 = scmp.ne.s32.totalorder %s70, %s84
      %p86 = scmp.eq.s32.totalorder %s18, 0
      %p87 = por %p85, %p86
      %s88 = ssub.s32 %s12, %s19
      %p89 = scmp.eq.s32.totalorder %s88, 0
      %s91 = sadd.s32 %s90, 1
      %s92 = scalar_select %p89, %s90, %s91
      %p95 = pneg %p89
      %p96 = scmp.eq.s32.totalorder %s12, 1
      %p97 = por %p95, %p96
      %p98 = scmp.ne.s32.totalorder %s90, %s93
      %p99 = scmp.eq.s32.totalorder %s12, 0
      %p100 = por %p98, %p99
      %p101 = scmp.ne.s32.totalorder %s90, %s93
      %p102 = scmp.eq.s32.totalorder %s17, 1
      %p103 = por %p101, %p102
      %p104 = scmp.ne.s32.totalorder %s93, %s94
      %p105 = scmp.eq.s32.totalorder %s17, 0
      %p106 = por %p104, %p105
      %p107 = scmp.ne.s32.totalorder %s93, %s94
      %p108 = scmp.eq.s32.totalorder %s18, 1
      %p109 = por %p107, %p108
      %p111 = scmp.ne.s32.totalorder %s94, %s110
      %p112 = scmp.eq.s32.totalorder %s18, 0
      %p113 = por %p111, %p112
      %p114 = scmp.le.s32.totalorder 1, %s12
      %p115 = scmp.lt.s32.totalorder %s12, 3
      %p116 = pnand %p114, %p115
      %p117 = pneg %p116
      // Predicated region
      $region9: #{tpu_custom_call.1} parent=5 // pred_check
        _
      $region10: #{tpu_custom_call.1} parent=5 // pred_check_branch
        %119 = sbr.rel (%p116) target = $region12
      $region11: #{tpu_custom_call.1} parent=5 // pred_region
        %s120 = ssub.s32 %s12, 1
        // Predicated region
        $region13: #{tpu_custom_call.1} parent=11 // pred_check
          %p121 = pneg %p59
        $region14: #{tpu_custom_call.1} parent=11 // pred_check_branch
          %123 = sbr.rel (%p121) target = $region16
        $region15: #{tpu_custom_call.1} parent=11 // pred_region
          _
        $region16: #{tpu_custom_call.1} parent=11 // pred_fallthru
          _
        // Predicated region
        $region17: #{tpu_custom_call.1} parent=11 // pred_check
          %p124 = pneg %p80
        $region18: #{tpu_custom_call.1} parent=11 // pred_check_branch
          %126 = sbr.rel (%p124) target = $region20
        $region19: #{tpu_custom_call.1} parent=11 // pred_region
          _
        $region20: #{tpu_custom_call.1} parent=11 // pred_fallthru
          _
      $region12: #{tpu_custom_call.1} parent=5 // pred_fallthru
        _
      %p127 = scmp.lt.s32.totalorder %s12, 2
      // Predicated region
      $region21: #{tpu_custom_call.1} parent=5 // pred_check
        %p128 = pneg %p127
      $region22: #{tpu_custom_call.1} parent=5 // pred_check_branch
        %130 = sbr.rel (%p128) target = $region24
      $region23: #{tpu_custom_call.1} parent=5 // pred_region
        // Predicated region
        $region25: #{tpu_custom_call.1} parent=23 // pred_check
          %p131 = pneg %p32
        $region26: #{tpu_custom_call.1} parent=23 // pred_check_branch
          %133 = sbr.rel (%p131) target = $region28
        $region27: #{tpu_custom_call.1} parent=23 // pred_region
          %s134 = smul.u32 2, %s12
          %p135 = scmp.lt.s32.totalorder %s134, 3
          %s136 = scalar_select %p135, %s134, 3
          %s137 = smul.addr %s136, 8
          %s138 = scalar_lea.vmem %s0, %s137
          %s139 = smul.u32 2, %s12
        $region28: #{tpu_custom_call.1} parent=23 // pred_fallthru
          _
      $region24: #{tpu_custom_call.1} parent=5 // pred_fallthru
        _
      %p140 = scmp.le.s32.totalorder 1, %s12
      %p141 = scmp.lt.s32.totalorder %s12, 3
      %p142 = pnand %p140, %p141
      %p143 = pneg %p142
      // Predicated region
      $region29: #{tpu_custom_call.1} parent=5 // pred_check
        _
      $region30: #{tpu_custom_call.1} parent=5 // pred_check_branch
        %145 = sbr.rel (%p142) target = $region32
      $region31: #{tpu_custom_call.1} parent=5 // pred_region
        %s146 = ssub.s32 %s12, 1
        %s147 = smul.u32 2, %s17
        %p148 = scmp.lt.s32.totalorder %s147, 3
        %s149 = scalar_select %p148, %s147, 3
        %s150 = smul.addr %s149, 8
        %s151 = scalar_lea.vmem %s0, %s150
        %p152 = pneg %p38
        %p153 = pneg %p35
        %p154 = pneg %p59
        %p155 = pneg %p56
        %p156 = pneg %p80
        %p157 = pneg %p77
        %p158 = pneg %p106
        %p159 = pneg %p103
        %s160 = sand.u32 %s93, 1
        %s161 = scalar_lea.sflag [#allocation3], %s160
        %s162 = sand.u32 %s93, 1
        %s163 = smul.addr %s162, 16
        %s164 = scalar_lea.vmem [#allocation2], %s163
        %s165 = smul.u32 2, %s17
        %p166 = scmp.lt.s32.totalorder %s165, 3
        %s167 = scalar_select %p166, %s165, 3
        %s168 = smul.addr %s167, 8
        %s169 = scalar_lea.vmem %s0, %s168
        %s170 = smul.u32 2, %s17
        %s171 = smul.u32 2, %s17
        %v172 = vld [vmem:[%s169] sm:$0xff]
        %v173 = vld [vmem:[%s169 + $0x8] sm:$0xff]
        %v174 = vld [vmem:[%s1] sm:$0xff]
        %v175 = vld [vmem:[%s1 + $0x8] sm:$0xff]
        %v176 = vld [vmem:[%s1 + $0x10] sm:$0xff]
        %v177 = vld [vmem:[%s1 + $0x18] sm:$0xff]
        %v178 = vld [vmem:[%s1 + $0x20] sm:$0xff]
        %v179 = vld [vmem:[%s1 + $0x28] sm:$0xff]
        %v180 = vld [vmem:[%s2] sm:$0x1]
        %v182 = vlaneseq
        %v183 = vshrl.u32 %v182, 7
        %v184 = vsub.s32 0, %v183
        %v185 = vrot.slane %v180, %v184
        %vm187 = vcmask 392192
        %v189 = vsel %vm187, %v172, 0
        %v192 = vsel %vm187, %v173, 0
        %194 = vmatprep.subr.mxu0 0.0
        %195 = vmatpush1.msra.mxu0 0.0
        %196 = vmatprep.subr.mxu0 0.0
        %197 = vmatpush1.msra.mxu0 0.0
        %198 = vmatprep.subr.mxu0 0.0
        %199 = vmatpush1.msra.mxu0 0.0
        %200 = vmatprep.subr.mxu0 0.0
        %201 = vmatpush1.msra.mxu0 0.0
        %202 = vmatprep.subr.mxu0 0.0
        %203 = vmatpush1.msra.mxu0 0.0
        %204 = vmatprep.subr.mxu0 0.0
        %205 = vmatpush1.msra.mxu0 0.0
        %206 = vmatprep.subr.mxu0 0.0
        %207 = vmatpush1.msra.mxu0 0.0
        %208 = vmatprep.subr.mxu0 0.0
        %209 = vmatpush1.msra.mxu0 0.0
        %210 = vmatprep.subr.mxu0 0.0
        %211 = vmatpush1.msra.mxu0 0.0
        %212 = vmatprep.subr.mxu0 0.0
        %213 = vmatpush1.msra.mxu0 0.0
        %214 = vmatprep.subr.mxu0 0.0
        %215 = vmatpush1.msra.mxu0 %v179
        %216 = vmatprep.subr.mxu0 0.0
        %217 = vmatpush1.msra.mxu0 %v178
        %218 = vmatprep.subr.mxu0 0.0
        %219 = vmatpush1.msra.mxu0 %v177
        %220 = vmatprep.subr.mxu0 0.0
        %221 = vmatpush1.msra.mxu0 %v176
        %222 = vmatprep.subr.mxu0 0.0
        %223 = vmatpush1.msra.mxu0 %v175
        %224 = vmatprep.subr.mxu0 0.0
        %225 = vmatpush1.msra.mxu0 %v174
        %226 = vmatprep.subr.mxu0 0.0
        %227 = vmatpush2.msra.mxu0 0.0
        %228 = vmatprep.subr.mxu0 0.0
        %229 = vmatpush2.msra.mxu0 0.0
        %230 = vmatprep.subr.mxu0 0.0
        %231 = vmatpush2.msra.mxu0 0.0
        %232 = vmatprep.subr.mxu0 0.0
        %233 = vmatpush2.msra.mxu0 0.0
        %234 = vmatprep.subr.mxu0 0.0
        %235 = vmatpush2.msra.mxu0 0.0
        %236 = vmatprep.subr.mxu0 0.0
        %237 = vmatpush2.msra.mxu0 0.0
        %238 = vmatprep.subr.mxu0 0.0
        %239 = vmatpush2.msra.mxu0 0.0
        %240 = vmatprep.subr.mxu0 0.0
        %241 = vmatpush2.msra.mxu0 0.0
        %242 = vmatprep.subr.mxu0 0.0
        %243 = vmatpush2.msra.mxu0 0.0
        %244 = vmatprep.subr.mxu0 0.0
        %245 = vmatpush2.msra.mxu0 0.0
        %246 = vmatprep.subr.mxu0 0.0
        %247 = vmatpush2.msra.mxu0 0.0
        %248 = vmatprep.subr.mxu0 0.0
        %249 = vmatpush2.msra.mxu0 0.0
        %250 = vmatprep.subr.mxu0 0.0
        %251 = vmatpush2.msra.mxu0 0.0
        %252 = vmatprep.subr.mxu0 0.0
        %253 = vmatpush2.msra.mxu0 0.0
        %254 = vmatprep.subr.mxu0 0.0
        %255 = vmatpush2.msra.mxu0 0.0
        %256 = vmatprep.subr.mxu0 0.0
        %257 = vmatpush2.msra.mxu0 0.0
        %258 = vmatprep.mubr.f32.mxu0 0.0
        %259 = vmatmul.mubr.f32.gmra.mxu0 %v189
        %v260 = vpop.f32.mrf.mxu0
        %v261 = vadd.f32 %v185, %v260
        %v262 = vpop.f32.mrf.mxu0
        %263 = vmatprep.mubr.f32.mxu0 0.0
        %264 = vmatmul.mubr.f32.gmra.mxu0 %v192
        %v265 = vpop.f32.mrf.mxu0
        %v266 = vadd.f32 %v185, %v265
        %v267 = vpop.f32.mrf.mxu0
        %268 = vdwg.mxu0
        %vm269 = vcmask 261120
        %270 = vst.msk [vmem:[%s164] sm:$0xff] %vm269, %v261
        %271 = vst.msk [vmem:[%s164 + $0x8] sm:$0xff] %vm269, %v266
        %s272 = sand.u32 %s93, 1
        %s273 = scalar_lea.sflag [#allocation3], %s272
        %s274 = sand.u32 %s93, 1
        %s275 = smul.addr %s274, 16
        %s276 = scalar_lea.vmem [#allocation2], %s275
        // Predicated region
        $region33: #{tpu_custom_call.1} parent=31 // pred_check
          %p277 = pneg %p103
        $region34: #{tpu_custom_call.1} parent=31 // pred_check_branch
          %279 = sbr.rel (%p277) target = $region36
        $region35: #{tpu_custom_call.1} parent=31 // pred_region
          %s280 = smul.u32 2, %s17
          %s282 = ssub.s32 256, 256
          %283 = vsyncadd %s273, %s282
          %s284 = smul.addr %s280, 128
          %s285 = scalar_lea.hbm %s3, %s284
          %s286 = sshll.u32 %s276, 4
          %s287 = int_to_ptr.vmem [resolvable:$true] %s286
          %292 = dma.vmem_to_hbm [thread:$0]  %s287, 256, %s285, %s273, 128, 128, 8
        $region36: #{tpu_custom_call.1} parent=31 // pred_fallthru
          _
      $region32: #{tpu_custom_call.1} parent=5 // pred_fallthru
        _
      %p293 = scmp.le.s32.totalorder 2, %s12
      // Predicated region
      $region37: #{tpu_custom_call.1} parent=5 // pred_check
        %p294 = pneg %p293
      $region38: #{tpu_custom_call.1} parent=5 // pred_check_branch
        %296 = sbr.rel (%p294) target = $region40
      $region39: #{tpu_custom_call.1} parent=5 // pred_region
        %s297 = ssub.s32 %s12, 2
        // Predicated region
        $region41: #{tpu_custom_call.1} parent=39 // pred_check
          %p298 = pneg %p109
        $region42: #{tpu_custom_call.1} parent=39 // pred_check_branch
          %300 = sbr.rel (%p298) target = $region44
        $region43: #{tpu_custom_call.1} parent=39 // pred_region
          %s301 = sand.u32 %s94, 1
          %s302 = scalar_lea.sflag [#allocation3], %s301
          %s303 = sand.u32 %s94, 1
          %s304 = smul.addr %s303, 16
          %s305 = scalar_lea.vmem [#allocation2], %s304
          %306 = dma.done %s302, 256
        $region44: #{tpu_custom_call.1} parent=39 // pred_fallthru
          _
      $region40: #{tpu_custom_call.1} parent=5 // pred_fallthru
        _
    $region6: #{tpu_custom_call.1} parent=1 // loop_footer
      %s16 = sadd.s32 1, %s12
    $region7: #{tpu_custom_call.1} parent=1 // loop_footer_branch
      %11 = sbr.rel target = $region3
    $region8: #{tpu_custom_call.1} parent=1 // loop_exit
      _
    %307 = vsyncpa [#allocation3], 1
    %s308 = scalar_lea.sflag [#allocation3], 1
    %309 = vsyncpa %s308, 1

</llo_original>
